<compile_context>
chip_gen: v7x
topology: tpu7x:2x2x1
jax: 0.10.0
libtpu: 0.0.40
codegen_flags: <defaults>
</compile_context>

<pallas_src>
import jax
import jax.numpy as jnp
from jax.experimental import pallas as pl
from jax.experimental.pallas import tpu as pltpu

K_IN = 28 * 28        # 784
K_PAD = 896           # 7 * 128  (lane-dense contraction dim for fc1)
H1 = 128
H2 = 64
H2_PAD = 128          # lane-dense hidden2
C_OUT = 10
OUT_PAD = 128         # lane-dense output (unmasked vst), sliced in wrapper
DEFAULT_TILE_B = 512  # multiple of 8 and 128; ~0.9 MiB bf16 per x tile


def mlp_kernel(x_ref, w1_ref, b1_ref, w2_ref, b2_ref, w3_ref, b3_ref, o_ref):
    # fc1: bf16 MXU, f32 accumulation; bias + ReLU in f32 (v5e-friendly VPU).
    h1 = jnp.dot(x_ref[...], w1_ref[...], preferred_element_type=jnp.float32)
    h1 = jnp.maximum(h1 + b1_ref[...], 0.0)
    # fc2 (+ ReLU). Padded hidden2 columns have zero weights/bias -> stay 0.
    h2 = jnp.dot(h1.astype(jnp.bfloat16), w2_ref[...],
                 preferred_element_type=jnp.float32)
    h2 = jnp.maximum(h2 + b2_ref[...], 0.0)
    # fc3 (logits). Padded output columns are exact zeros (zero W cols / bias).
    out = jnp.dot(h2.astype(jnp.bfloat16), w3_ref[...],
                  preferred_element_type=jnp.float32)
    o_ref[...] = (out + b3_ref[...]).astype(o_ref.dtype)


def _round_up(n, m):
    return (n + m - 1) // m * m


def mlp_forward(x_nchw, w1, b1, w2, b2, w3, b3, *, tile_b=DEFAULT_TILE_B):
    B = x_nchw.shape[0]

    # Wrapper-side glue: flatten NCHW -> (B, 784) (same ordering as nn.Flatten),
    # zero-pad to lane/sublane-dense shapes, cast MXU operands to bf16.
    x = x_nchw.reshape(B, -1)
    B_pad = _round_up(B, 8)
    tb = min(tile_b, B_pad)
    B_pad = _round_up(B_pad, tb)

    x_p = jnp.zeros((B_pad, K_PAD), jnp.bfloat16).at[:B, :K_IN].set(
        x.astype(jnp.bfloat16))
    w1_p = jnp.zeros((K_PAD, H1), jnp.bfloat16).at[:K_IN, :].set(
        w1.astype(jnp.bfloat16))
    b1_p = b1.reshape(1, H1).astype(jnp.float32)
    w2_p = jnp.zeros((H1, H2_PAD), jnp.bfloat16).at[:, :H2].set(
        w2.astype(jnp.bfloat16))
    b2_p = jnp.zeros((1, H2_PAD), jnp.float32).at[:, :H2].set(
        b2.reshape(1, H2).astype(jnp.float32))
    w3_p = jnp.zeros((H2_PAD, OUT_PAD), jnp.bfloat16).at[:H2, :C_OUT].set(
        w3.astype(jnp.bfloat16))
    b3_p = jnp.zeros((1, OUT_PAD), jnp.float32).at[:, :C_OUT].set(
        b3.reshape(1, C_OUT).astype(jnp.float32))

    grid = (B_pad // tb,)
    const = lambda i: (0, 0)  # weights/biases stay VMEM-resident across steps

    flops = 2 * B_pad * (K_PAD * H1 + H1 * H2_PAD + H2_PAD * OUT_PAD)
    bytes_accessed = int(
        x_p.size * 2 + w1_p.size * 2 + w2_p.size * 2 + w3_p.size * 2
        + (b1_p.size + b2_p.size + b3_p.size) * 4
        + B_pad * OUT_PAD * 4)

    out_pad = pl.pallas_call(
        mlp_kernel,
        out_shape=jax.ShapeDtypeStruct((B_pad, OUT_PAD), jnp.float32),
        grid=grid,
        in_specs=[
            pl.BlockSpec((tb, K_PAD), lambda i: (i, 0)),   # x: tiled over batch
            pl.BlockSpec((K_PAD, H1), const),              # w1
            pl.BlockSpec((1, H1), const),                  # b1
            pl.BlockSpec((H1, H2_PAD), const),             # w2
            pl.BlockSpec((1, H2_PAD), const),              # b2
            pl.BlockSpec((H2_PAD, OUT_PAD), const),        # w3
            pl.BlockSpec((1, OUT_PAD), const),             # b3
        ],
        out_specs=pl.BlockSpec((tb, OUT_PAD), lambda i: (i, 0)),
        compiler_params=pltpu.CompilerParams(
            dimension_semantics=("parallel",),
            vmem_limit_bytes=64 * 1024 * 1024,
        ),
        cost_estimate=pl.CostEstimate(
            flops=flops, transcendentals=0, bytes_accessed=bytes_accessed),
    )(x_p, w1_p, b1_p, w2_p, b2_p, w3_p, b3_p)

    # Slice off batch + lane padding (padded logit columns are exact zeros).
    return out_pad[:B, :C_OUT]


def init_params(key):
    k1, k2, k3, k4, k5, k6 = jax.random.split(key, 6)

    # nn.Linear-style init; weights stored as (in_features, out_features).
    def lin(kw, kb, fan_in, fan_out):
        bound = 1.0 / (fan_in ** 0.5)
        w = jax.random.uniform(kw, (fan_in, fan_out), jnp.float32, -bound, bound)
        b = jax.random.uniform(kb, (1, fan_out), jnp.float32, -bound, bound)
        return w, b

    w1, b1 = lin(k1, k2, K_IN, H1)
    w2, b2 = lin(k3, k4, H1, H2)
    w3, b3 = lin(k5, k6, H2, C_OUT)
    return w1, b1, w2, b2, w3, b3


def _reference(x_nchw, w1, b1, w2, b2, w3, b3):
    # Pure-JAX reference with the same bf16-operand / f32-accumulate numerics.
    x = x_nchw.reshape(x_nchw.shape[0], -1).astype(jnp.bfloat16)
    h1 = jnp.dot(x, w1.astype(jnp.bfloat16),
                 preferred_element_type=jnp.float32) + b1
    h1 = jnp.maximum(h1, 0.0)
    h2 = jnp.dot(h1.astype(jnp.bfloat16), w2.astype(jnp.bfloat16),
                 preferred_element_type=jnp.float32) + b2
    h2 = jnp.maximum(h2, 0.0)
    return jnp.dot(h2.astype(jnp.bfloat16), w3.astype(jnp.bfloat16),
                   preferred_element_type=jnp.float32) + b3


if __name__ == "__main__":
    key = jax.random.PRNGKey(0)
    kx, kp = jax.random.split(key)

    B = 8
    x = jax.random.normal(kx, (B, 1, 28, 28), jnp.float32)  # NCHW like PyTorch
    params = init_params(kp)

    out = mlp_forward(x, *params)
    out = jax.block_until_ready(out)
    assert out.shape == (B, C_OUT)

    ref = _reference(x, *params)
    assert jnp.allclose(out, ref, atol=2e-2, rtol=2e-2), (
        float(jnp.max(jnp.abs(out - ref))))

    print("KERNEL_OK")
</pallas_src>

<mosaic_0001>
module attributes {stable_mosaic.version = 11 : i64} {
  func.func @mlp_kernel(%arg0: i32, %arg1: memref<8x896xbf16, #tpu.memory_space<vmem>>, %arg2: memref<896x128xbf16, #tpu.memory_space<vmem>>, %arg3: memref<1x128xf32, #tpu.memory_space<vmem>>, %arg4: memref<128x128xbf16, #tpu.memory_space<vmem>>, %arg5: memref<1x128xf32, #tpu.memory_space<vmem>>, %arg6: memref<128x128xbf16, #tpu.memory_space<vmem>>, %arg7: memref<1x128xf32, #tpu.memory_space<vmem>>, %arg8: memref<8x128xf32, #tpu.memory_space<vmem>>) attributes {dimension_semantics = [#tpu.dimension_semantics<parallel>], iteration_bounds = array<i64: 1>, scalar_prefetch = 0 : i64, scratch_operands = 0 : i64, tpu.core_type = #tpu.core_type<tc>, window_params = [{transform_indices = @transform_0, window_bounds = array<i64: 8, 896>}, {pipeline_mode = #tpu.pipeline_mode<synchronous>, transform_indices = @transform_1, window_bounds = array<i64: 896, 128>}, {pipeline_mode = #tpu.pipeline_mode<synchronous>, transform_indices = @transform_2, window_bounds = array<i64: 1, 128>}, {pipeline_mode = #tpu.pipeline_mode<synchronous>, transform_indices = @transform_3, window_bounds = array<i64: 128, 128>}, {pipeline_mode = #tpu.pipeline_mode<synchronous>, transform_indices = @transform_4, window_bounds = array<i64: 1, 128>}, {pipeline_mode = #tpu.pipeline_mode<synchronous>, transform_indices = @transform_5, window_bounds = array<i64: 128, 128>}, {pipeline_mode = #tpu.pipeline_mode<synchronous>, transform_indices = @transform_6, window_bounds = array<i64: 1, 128>}, {transform_indices = @transform_7, window_bounds = array<i64: 8, 128>}]} {
    %c0 = arith.constant 0 : index
    %c0_0 = arith.constant 0 : index
    %0 = vector.load %arg1[%c0, %c0_0] : memref<8x896xbf16, #tpu.memory_space<vmem>>, vector<8x896xbf16>
    %c0_1 = arith.constant 0 : index
    %c0_2 = arith.constant 0 : index
    %1 = vector.load %arg2[%c0_1, %c0_2] : memref<896x128xbf16, #tpu.memory_space<vmem>>, vector<896x128xbf16>
    %cst = arith.constant dense<0.000000e+00> : vector<8x128xf32>
    %2 = tpu.matmul %0, %1, %cst {dimension_numbers = #tpu.dot_dimension_numbers<[1], [0], [0], [1], [0, 0, 1, 1], [], []>} : vector<8x896xbf16>, vector<896x128xbf16>, vector<8x128xf32> -> vector<8x128xf32>
    %c0_3 = arith.constant 0 : index
    %c0_4 = arith.constant 0 : index
    %3 = vector.load %arg3[%c0_3, %c0_4] : memref<1x128xf32, #tpu.memory_space<vmem>>, vector<1x128xf32>
    %4 = vector.broadcast %3 : vector<1x128xf32> to vector<8x128xf32>
    %5 = arith.addf %2, %4 : vector<8x128xf32>
    %cst_5 = arith.constant 0.000000e+00 : f32
    %6 = vector.broadcast %cst_5 : f32 to vector<8x128xf32>
    %7 = arith.maximumf %5, %6 : vector<8x128xf32>
    %8 = arith.truncf %7 : vector<8x128xf32> to vector<8x128xbf16>
    %c0_6 = arith.constant 0 : index
    %c0_7 = arith.constant 0 : index
    %9 = vector.load %arg4[%c0_6, %c0_7] : memref<128x128xbf16, #tpu.memory_space<vmem>>, vector<128x128xbf16>
    %cst_8 = arith.constant dense<0.000000e+00> : vector<8x128xf32>
    %10 = tpu.matmul %8, %9, %cst_8 {dimension_numbers = #tpu.dot_dimension_numbers<[1], [0], [0], [1], [0, 0, 1, 1], [], []>} : vector<8x128xbf16>, vector<128x128xbf16>, vector<8x128xf32> -> vector<8x128xf32>
    %c0_9 = arith.constant 0 : index
    %c0_10 = arith.constant 0 : index
    %11 = vector.load %arg5[%c0_9, %c0_10] : memref<1x128xf32, #tpu.memory_space<vmem>>, vector<1x128xf32>
    %12 = vector.broadcast %11 : vector<1x128xf32> to vector<8x128xf32>
    %13 = arith.addf %10, %12 : vector<8x128xf32>
    %cst_11 = arith.constant 0.000000e+00 : f32
    %14 = vector.broadcast %cst_11 : f32 to vector<8x128xf32>
    %15 = arith.maximumf %13, %14 : vector<8x128xf32>
    %16 = arith.truncf %15 : vector<8x128xf32> to vector<8x128xbf16>
    %c0_12 = arith.constant 0 : index
    %c0_13 = arith.constant 0 : index
    %17 = vector.load %arg6[%c0_12, %c0_13] : memref<128x128xbf16, #tpu.memory_space<vmem>>, vector<128x128xbf16>
    %cst_14 = arith.constant dense<0.000000e+00> : vector<8x128xf32>
    %18 = tpu.matmul %16, %17, %cst_14 {dimension_numbers = #tpu.dot_dimension_numbers<[1], [0], [0], [1], [0, 0, 1, 1], [], []>} : vector<8x128xbf16>, vector<128x128xbf16>, vector<8x128xf32> -> vector<8x128xf32>
    %c0_15 = arith.constant 0 : index
    %c0_16 = arith.constant 0 : index
    %19 = vector.load %arg7[%c0_15, %c0_16] : memref<1x128xf32, #tpu.memory_space<vmem>>, vector<1x128xf32>
    %20 = vector.broadcast %19 : vector<1x128xf32> to vector<8x128xf32>
    %21 = arith.addf %18, %20 : vector<8x128xf32>
    %c0_17 = arith.constant 0 : index
    %c0_18 = arith.constant 0 : index
    %22 = vector.load %arg8[%c0_17, %c0_18] : memref<8x128xf32, #tpu.memory_space<vmem>>, vector<8x128xf32>
    tpu.vector_store %arg8[%c0_17, %c0_18], %21 {strides = array<i32>} : memref<8x128xf32, #tpu.memory_space<vmem>>, vector<8x128xf32>,
    return
  }
  func.func @transform_0(%arg0: i32) -> (i32, i32) {
    %c0_i32 = arith.constant 0 : i32
    %c0_i32_0 = arith.constant 0 : i32
    return %arg0, %c0_i32 : i32, i32
  }
  func.func @transform_1(%arg0: i32) -> (i32, i32) {
    %c0_i32 = arith.constant 0 : i32
    %c0_i32_0 = arith.constant 0 : i32
    %c0_i32_1 = arith.constant 0 : i32
    return %c0_i32, %c0_i32_0 : i32, i32
  }
  func.func @transform_2(%arg0: i32) -> (i32, i32) {
    %c0_i32 = arith.constant 0 : i32
    %c0_i32_0 = arith.constant 0 : i32
    %c0_i32_1 = arith.constant 0 : i32
    return %c0_i32, %c0_i32_0 : i32, i32
  }
  func.func @transform_3(%arg0: i32) -> (i32, i32) {
    %c0_i32 = arith.constant 0 : i32
    %c0_i32_0 = arith.constant 0 : i32
    %c0_i32_1 = arith.constant 0 : i32
    return %c0_i32, %c0_i32_0 : i32, i32
  }
  func.func @transform_4(%arg0: i32) -> (i32, i32) {
    %c0_i32 = arith.constant 0 : i32
    %c0_i32_0 = arith.constant 0 : i32
    %c0_i32_1 = arith.constant 0 : i32
    return %c0_i32, %c0_i32_0 : i32, i32
  }
  func.func @transform_5(%arg0: i32) -> (i32, i32) {
    %c0_i32 = arith.constant 0 : i32
    %c0_i32_0 = arith.constant 0 : i32
    %c0_i32_1 = arith.constant 0 : i32
    return %c0_i32, %c0_i32_0 : i32, i32
  }
  func.func @transform_6(%arg0: i32) -> (i32, i32) {
    %c0_i32 = arith.constant 0 : i32
    %c0_i32_0 = arith.constant 0 : i32
    %c0_i32_1 = arith.constant 0 : i32
    return %c0_i32, %c0_i32_0 : i32, i32
  }
  func.func @transform_7(%arg0: i32) -> (i32, i32) {
    %c0_i32 = arith.constant 0 : i32
    %c0_i32_0 = arith.constant 0 : i32
    return %arg0, %c0_i32 : i32, i32
  }
}

</mosaic_0001>

<llo_original>
// kernel: tpu_custom_call.1
$region0: #{tpu_custom_call.1}
  #allocation0 [shape = 'u32[]', space=smem, size = 0x4, offset = 0x4, fixed_abs, tag = 'smem constant byte address 0x4 - core index']
  #allocation1 [shape = 'u32[144,128]{1,0:T(1,128)}', space=vmem, size = 0x12000, scoped, tag = 'internal scratch']
  %s0 = inlined_call_operand.hbm [shape: bf16[8,896], index: 0, kind: input, shape index: {}]
  %s1 = inlined_call_operand.hbm [shape: bf16[896,128], index: 1, kind: input, shape index: {}]
  %s2 = inlined_call_operand.hbm [shape: f32[1,128], index: 2, kind: input, shape index: {}]
  %s3 = inlined_call_operand.hbm [shape: bf16[128,128], index: 3, kind: input, shape index: {}]
  %s4 = inlined_call_operand.hbm [shape: f32[1,128], index: 4, kind: input, shape index: {}]
  %s5 = inlined_call_operand.hbm [shape: bf16[128,128], index: 5, kind: input, shape index: {}]
  %s6 = inlined_call_operand.hbm [shape: f32[1,128], index: 6, kind: input, shape index: {}]
  %s7 = inlined_call_operand.hbm [shape: f32[8,128], index: 7, kind: output, shape index: {}]
  %s8 = sld [smem:[#allocation0]]
  $region66: #{tpu_custom_call.1} parent=0
    _
  %s10 = ssub.s32 1, %s8
  %s11 = scalar_select 0, %s10, %s8
  $region1: #{tpu_custom_call.1} parent=0
    #allocation2 [shape = 'u8[14336]{0}', space=vmem, size = 0x3800, scoped, tag = 'input window, operand 0, single buffered']
    #allocation3 [shape = 's32[1]{0}', space=sflag, size = 0x4, scoped, tag = 'scoped memory for tpu_custom_call.1']
    #allocation4 [shape = 's32[1]{0}', space=sflag, size = 0x4, scoped, tag = 'scoped memory for tpu_custom_call.1']
    #allocation5 [shape = 'u8[229376]{0}', space=vmem, size = 0x38000, scoped, tag = 'input window, operand 1, single buffered']
    #allocation6 [shape = 's32[1]{0}', space=sflag, size = 0x4, scoped, tag = 'scoped memory for tpu_custom_call.1']
    #allocation7 [shape = 'u8[512]{0}', space=vmem, size = 0x400, scoped, tag = 'input window, operand 2, single buffered']
    #allocation8 [shape = 'u8[32768]{0}', space=vmem, size = 0x8000, scoped, tag = 'input window, operand 3, single buffered']
    #allocation9 [shape = 's32[1]{0}', space=sflag, size = 0x4, scoped, tag = 'scoped memory for tpu_custom_call.1']
    #allocation10 [shape = 'u8[512]{0}', space=vmem, size = 0x400, scoped, tag = 'input window, operand 4, single buffered']
    #allocation11 [shape = 'u8[32768]{0}', space=vmem, size = 0x8000, scoped, tag = 'input window, operand 5, single buffered']
    #allocation12 [shape = 's32[1]{0}', space=sflag, size = 0x4, scoped, tag = 'scoped memory for tpu_custom_call.1']
    #allocation13 [shape = 'u8[512]{0}', space=vmem, size = 0x400, scoped, tag = 'input window, operand 6, single buffered']
    #allocation14 [shape = 'u8[4096]{0}', space=vmem, size = 0x1000, scoped, tag = 'output window, operand 0, single buffered']
    %12 = vsyncpa [#allocation3], 0
    %13 = vsyncpa [#allocation6], 0
    %14 = vsyncpa [#allocation9], 0
    %15 = vsyncpa [#allocation12], 0
    %16 = vsyncpa [#allocation4], 0
    // Predicated region
    $region2: #{tpu_custom_call.1} parent=1 // pred_check
      _
    $region3: #{tpu_custom_call.1} parent=1 // pred_check_branch
      %18 = sbr.rel (0) target = $region5
    $region4: #{tpu_custom_call.1} parent=1 // pred_region
      %s20 = ssub.s32 448, 448
      %21 = vsyncadd [#allocation3], %s20
      %s23 = sshll.u32 [#allocation2], 4
      %s24 = int_to_ptr.vmem [resolvable:$true] %s23
      %26 = dma.hbm_to_vmem [thread:$0]  %s0, 448, %s24, [#allocation3]
    $region5: #{tpu_custom_call.1} parent=1 // pred_fallthru
      _
    // Predicated region
    $region6: #{tpu_custom_call.1} parent=1 // pred_check
      _
    $region7: #{tpu_custom_call.1} parent=1 // pred_check_branch
      %28 = sbr.rel (0) target = $region9
    $region8: #{tpu_custom_call.1} parent=1 // pred_region
      %s30 = ssub.s32 7168, 7168
      %31 = vsyncadd [#allocation6], %s30
      %s32 = sshll.u32 [#allocation5], 4
      %s33 = int_to_ptr.vmem [resolvable:$true] %s32
      %38 = dma.hbm_to_vmem [thread:$0]  %s1, 7168, %s33, [#allocation6], 64, 64, 4
    $region9: #{tpu_custom_call.1} parent=1 // pred_fallthru
      _
    // Predicated region
    $region10: #{tpu_custom_call.1} parent=1 // pred_check
      _
    $region11: #{tpu_custom_call.1} parent=1 // pred_check_branch
      %40 = sbr.rel (0) target = $region13
    $region12: #{tpu_custom_call.1} parent=1 // pred_region
      %s42 = ssub.s32 16, 16
      %43 = vsyncadd [#allocation6], %s42
      %s45 = sshll.u32 [#allocation7], 4
      %s46 = int_to_ptr.vmem [resolvable:$true] %s45
      %48 = dma.hbm_to_vmem [thread:$0]  %s2, 16, %s46, [#allocation6]
    $region13: #{tpu_custom_call.1} parent=1 // pred_fallthru
      _
    // Predicated region
    $region14: #{tpu_custom_call.1} parent=1 // pred_check
      _
    $region15: #{tpu_custom_call.1} parent=1 // pred_check_branch
      %50 = sbr.rel (0) target = $region17
    $region16: #{tpu_custom_call.1} parent=1 // pred_region
      %s52 = ssub.s32 1024, 1024
      %53 = vsyncadd [#allocation9], %s52
      %s54 = sshll.u32 [#allocation8], 4
      %s55 = int_to_ptr.vmem [resolvable:$true] %s54
      %60 = dma.hbm_to_vmem [thread:$0]  %s3, 1024, %s55, [#allocation9], 64, 64, 4
    $region17: #{tpu_custom_call.1} parent=1 // pred_fallthru
      _
    // Predicated region
    $region18: #{tpu_custom_call.1} parent=1 // pred_check
      _
    $region19: #{tpu_custom_call.1} parent=1 // pred_check_branch
      %62 = sbr.rel (0) target = $region21
    $region20: #{tpu_custom_call.1} parent=1 // pred_region
      %s64 = ssub.s32 16, 16
      %65 = vsyncadd [#allocation9], %s64
      %s67 = sshll.u32 [#allocation10], 4
      %s68 = int_to_ptr.vmem [resolvable:$true] %s67
      %70 = dma.hbm_to_vmem [thread:$0]  %s4, 16, %s68, [#allocation9]
    $region21: #{tpu_custom_call.1} parent=1 // pred_fallthru
      _
    // Predicated region
    $region22: #{tpu_custom_call.1} parent=1 // pred_check
      _
    $region23: #{tpu_custom_call.1} parent=1 // pred_check_branch
      %72 = sbr.rel (0) target = $region25
    $region24: #{tpu_custom_call.1} parent=1 // pred_region
      %s74 = ssub.s32 1024, 1024
      %75 = vsyncadd [#allocation12], %s74
      %s76 = sshll.u32 [#allocation11], 4
      %s77 = int_to_ptr.vmem [resolvable:$true] %s76
      %82 = dma.hbm_to_vmem [thread:$0]  %s5, 1024, %s77, [#allocation12], 64, 64, 4
    $region25: #{tpu_custom_call.1} parent=1 // pred_fallthru
      _
    // Predicated region
    $region26: #{tpu_custom_call.1} parent=1 // pred_check
      _
    $region27: #{tpu_custom_call.1} parent=1 // pred_check_branch
      %84 = sbr.rel (0) target = $region29
    $region28: #{tpu_custom_call.1} parent=1 // pred_region
      %s86 = ssub.s32 16, 16
      %87 = vsyncadd [#allocation12], %s86
      %s89 = sshll.u32 [#allocation13], 4
      %s90 = int_to_ptr.vmem [resolvable:$true] %s89
      %92 = dma.hbm_to_vmem [thread:$0]  %s6, 16, %s90, [#allocation12]
    $region29: #{tpu_custom_call.1} parent=1 // pred_fallthru
      _
    // Predicated region
    $region30: #{tpu_custom_call.1} parent=1 // pred_check
      _
    $region31: #{tpu_custom_call.1} parent=1 // pred_check_branch
      %94 = sbr.rel (0) target = $region33
    $region32: #{tpu_custom_call.1} parent=1 // pred_region
      %95 = dma.done [#allocation3], 448
    $region33: #{tpu_custom_call.1} parent=1 // pred_fallthru
      _
    // Predicated region
    $region34: #{tpu_custom_call.1} parent=1 // pred_check
      _
    $region35: #{tpu_custom_call.1} parent=1 // pred_check_branch
      %97 = sbr.rel (0) target = $region37
    $region36: #{tpu_custom_call.1} parent=1 // pred_region
      %98 = dma.done [#allocation6], 7168
    $region37: #{tpu_custom_call.1} parent=1 // pred_fallthru
      _
    // Predicated region
    $region38: #{tpu_custom_call.1} parent=1 // pred_check
      _
    $region39: #{tpu_custom_call.1} parent=1 // pred_check_branch
      %100 = sbr.rel (0) target = $region41
    $region40: #{tpu_custom_call.1} parent=1 // pred_region
      %101 = dma.done [#allocation6], 16
    $region41: #{tpu_custom_call.1} parent=1 // pred_fallthru
      _
    // Predicated region
    $region42: #{tpu_custom_call.1} parent=1 // pred_check
      _
    $region43: #{tpu_custom_call.1} parent=1 // pred_check_branch
      %103 = sbr.rel (0) target = $region45
    $region44: #{tpu_custom_call.1} parent=1 // pred_region
      %104 = dma.done [#allocation9], 1024
    $region45: #{tpu_custom_call.1} parent=1 // pred_fallthru
      _
    // Predicated region
    $region46: #{tpu_custom_call.1} parent=1 // pred_check
      _
    $region47: #{tpu_custom_call.1} parent=1 // pred_check_branch
      %106 = sbr.rel (0) target = $region49
    $region48: #{tpu_custom_call.1} parent=1 // pred_region
      %107 = dma.done [#allocation9], 16
    $region49: #{tpu_custom_call.1} parent=1 // pred_fallthru
      _
    // Predicated region
    $region50: #{tpu_custom_call.1} parent=1 // pred_check
      _
    $region51: #{tpu_custom_call.1} parent=1 // pred_check_branch
      %109 = sbr.rel (0) target = $region53
    $region52: #{tpu_custom_call.1} parent=1 // pred_region
      %110 = dma.done [#allocation12], 1024
    $region53: #{tpu_custom_call.1} parent=1 // pred_fallthru
      _
    // Predicated region
    $region54: #{tpu_custom_call.1} parent=1 // pred_check
      _
    $region55: #{tpu_custom_call.1} parent=1 // pred_check_branch
      %112 = sbr.rel (0) target = $region57
    $region56: #{tpu_custom_call.1} parent=1 // pred_region
      %113 = dma.done [#allocation12], 16
    $region57: #{tpu_custom_call.1} parent=1 // pred_fallthru
      _
    %v115 = vld [vmem:[#allocation2] sm:$0xff]
    %v116 = vld [vmem:[#allocation2 + $0x8] sm:$0xff]
    %v117 = vld [vmem:[#allocation2 + $0x10] sm:$0xff]
    %v118 = vld [vmem:[#allocation2 + $0x18] sm:$0xf]
    %v119 = vld [vmem:[#allocation5] sm:$0xf]
    %v120 = vld [vmem:[#allocation5 + $0x4] sm:$0xf]
    %v121 = vld [vmem:[#allocation5 + $0x8] sm:$0xf]
    %v122 = vld [vmem:[#allocation5 + $0xc] sm:$0xf]
    %v123 = vld [vmem:[#allocation5 + $0x10] sm:$0xf]
    %v124 = vld [vmem:[#allocation5 + $0x14] sm:$0xf]
    %v125 = vld [vmem:[#allocation5 + $0x18] sm:$0xf]
    %v126 = vld [vmem:[#allocation5 + $0x1c] sm:$0xf]
    %v127 = vld [vmem:[#allocation5 + $0x20] sm:$0xf]
    %v128 = vld [vmem:[#allocation5 + $0x24] sm:$0xf]
    %v129 = vld [vmem:[#allocation5 + $0x28] sm:$0xf]
    %v130 = vld [vmem:[#allocation5 + $0x2c] sm:$0xf]
    %v131 = vld [vmem:[#allocation5 + $0x30] sm:$0xf]
    %v132 = vld [vmem:[#allocation5 + $0x34] sm:$0xf]
    %v133 = vld [vmem:[#allocation5 + $0x38] sm:$0xf]
    %v134 = vld [vmem:[#allocation5 + $0x3c] sm:$0xf]
    %v135 = vld [vmem:[#allocation5 + $0x40] sm:$0xf]
    %v136 = vld [vmem:[#allocation5 + $0x44] sm:$0xf]
    %v137 = vld [vmem:[#allocation5 + $0x48] sm:$0xf]
    %v138 = vld [vmem:[#allocation5 + $0x4c] sm:$0xf]
    %v139 = vld [vmem:[#allocation5 + $0x50] sm:$0xf]
    %v140 = vld [vmem:[#allocation5 + $0x54] sm:$0xf]
    %v141 = vld [vmem:[#allocation5 + $0x58] sm:$0xf]
    %v142 = vld [vmem:[#allocation5 + $0x5c] sm:$0xf]
    %v143 = vld [vmem:[#allocation5 + $0x60] sm:$0xf]
    %v144 = vld [vmem:[#allocation5 + $0x64] sm:$0xf]
    %v145 = vld [vmem:[#allocation5 + $0x68] sm:$0xf]
    %v146 = vld [vmem:[#allocation5 + $0x6c] sm:$0xf]
    %v147 = vld [vmem:[#allocation5 + $0x70] sm:$0xf]
    %v148 = vld [vmem:[#allocation5 + $0x74] sm:$0xf]
    %v149 = vld [vmem:[#allocation5 + $0x78] sm:$0xf]
    %v150 = vld [vmem:[#allocation5 + $0x7c] sm:$0xf]
    %v151 = vld [vmem:[#allocation5 + $0x80] sm:$0xf]
    %v152 = vld [vmem:[#allocation5 + $0x84] sm:$0xf]
    %v153 = vld [vmem:[#allocation5 + $0x88] sm:$0xf]
    %v154 = vld [vmem:[#allocation5 + $0x8c] sm:$0xf]
    %v155 = vld [vmem:[#allocation5 + $0x90] sm:$0xf]
    %v156 = vld [vmem:[#allocation5 + $0x94] sm:$0xf]
    %v157 = vld [vmem:[#allocation5 + $0x98] sm:$0xf]
    %v158 = vld [vmem:[#allocation5 + $0x9c] sm:$0xf]
    %v159 = vld [vmem:[#allocation5 + $0xa0] sm:$0xf]
    %v160 = vld [vmem:[#allocation5 + $0xa4] sm:$0xf]
    %v161 = vld [vmem:[#allocation5 + $0xa8] sm:$0xf]
    %v162 = vld [vmem:[#allocation5 + $0xac] sm:$0xf]
    %v163 = vld [vmem:[#allocation5 + $0xb0] sm:$0xf]
    %v164 = vld [vmem:[#allocation5 + $0xb4] sm:$0xf]
    %v165 = vld [vmem:[#allocation5 + $0xb8] sm:$0xf]
    %v166 = vld [vmem:[#allocation5 + $0xbc] sm:$0xf]
    %v167 = vld [vmem:[#allocation5 + $0xc0] sm:$0xf]
    %v168 = vld [vmem:[#allocation5 + $0xc4] sm:$0xf]
    %v169 = vld [vmem:[#allocation5 + $0xc8] sm:$0xf]
    %v170 = vld [vmem:[#allocation5 + $0xcc] sm:$0xf]
    %v171 = vld [vmem:[#allocation5 + $0xd0] sm:$0xf]
    %v172 = vld [vmem:[#allocation5 + $0xd4] sm:$0xf]
    %v173 = vld [vmem:[#allocation5 + $0xd8] sm:$0xf]
    %v174 = vld [vmem:[#allocation5 + $0xdc] sm:$0xf]
    %v175 = vld [vmem:[#allocation5 + $0xe0] sm:$0xf]
    %v176 = vld [vmem:[#allocation5 + $0xe4] sm:$0xf]
    %v177 = vld [vmem:[#allocation5 + $0xe8] sm:$0xf]
    %v178 = vld [vmem:[#allocation5 + $0xec] sm:$0xf]
    %v179 = vld [vmem:[#allocation5 + $0xf0] sm:$0xf]
    %v180 = vld [vmem:[#allocation5 + $0xf4] sm:$0xf]
    %v181 = vld [vmem:[#allocation5 + $0xf8] sm:$0xf]
    %v182 = vld [vmem:[#allocation5 + $0xfc] sm:$0xf]
    %v183 = vld [vmem:[#allocation5 + $0x100] sm:$0xf]
    %v184 = vld [vmem:[#allocation5 + $0x104] sm:$0xf]
    %v185 = vld [vmem:[#allocation5 + $0x108] sm:$0xf]
    %v186 = vld [vmem:[#allocation5 + $0x10c] sm:$0xf]
    %v187 = vld [vmem:[#allocation5 + $0x110] sm:$0xf]
    %v188 = vld [vmem:[#allocation5 + $0x114] sm:$0xf]
    %v189 = vld [vmem:[#allocation5 + $0x118] sm:$0xf]
    %v190 = vld [vmem:[#allocation5 + $0x11c] sm:$0xf]
    %v191 = vld [vmem:[#allocation5 + $0x120] sm:$0xf]
    %v192 = vld [vmem:[#allocation5 + $0x124] sm:$0xf]
    %v193 = vld [vmem:[#allocation5 + $0x128] sm:$0xf]
    %v194 = vld [vmem:[#allocation5 + $0x12c] sm:$0xf]
    %v195 = vld [vmem:[#allocation5 + $0x130] sm:$0xf]
    %v196 = vld [vmem:[#allocation5 + $0x134] sm:$0xf]
    %v197 = vld [vmem:[#allocation5 + $0x138] sm:$0xf]
    %v198 = vld [vmem:[#allocation5 + $0x13c] sm:$0xf]
    %v199 = vld [vmem:[#allocation5 + $0x140] sm:$0xf]
    %v200 = vld [vmem:[#allocation5 + $0x144] sm:$0xf]
    %v201 = vld [vmem:[#allocation5 + $0x148] sm:$0xf]
    %v202 = vld [vmem:[#allocation5 + $0x14c] sm:$0xf]
    %v203 = vld [vmem:[#allocation5 + $0x150] sm:$0xf]
    %v204 = vld [vmem:[#allocation5 + $0x154] sm:$0xf]
    %v205 = vld [vmem:[#allocation5 + $0x158] sm:$0xf]
    %v206 = vld [vmem:[#allocation5 + $0x15c] sm:$0xf]
    %v207 = vld [vmem:[#allocation5 + $0x160] sm:$0xf]
    %v208 = vld [vmem:[#allocation5 + $0x164] sm:$0xf]
    %v209 = vld [vmem:[#allocation5 + $0x168] sm:$0xf]
    %v210 = vld [vmem:[#allocation5 + $0x16c] sm:$0xf]
    %v211 = vld [vmem:[#allocation5 + $0x170] sm:$0xf]
    %v212 = vld [vmem:[#allocation5 + $0x174] sm:$0xf]
    %v213 = vld [vmem:[#allocation5 + $0x178] sm:$0xf]
    %v214 = vld [vmem:[#allocation5 + $0x17c] sm:$0xf]
    %v215 = vld [vmem:[#allocation5 + $0x180] sm:$0xf]
    %v216 = vld [vmem:[#allocation5 + $0x184] sm:$0xf]
    %v217 = vld [vmem:[#allocation5 + $0x188] sm:$0xf]
    %v218 = vld [vmem:[#allocation5 + $0x18c] sm:$0xf]
    %v219 = vld [vmem:[#allocation5 + $0x190] sm:$0xf]
    %v220 = vld [vmem:[#allocation5 + $0x194] sm:$0xf]
    %v221 = vld [vmem:[#allocation5 + $0x198] sm:$0xf]
    %v222 = vld [vmem:[#allocation5 + $0x19c] sm:$0xf]
    %v223 = vld [vmem:[#allocation5 + $0x1a0] sm:$0xf]
    %v224 = vld [vmem:[#allocation5 + $0x1a4] sm:$0xf]
    %v225 = vld [vmem:[#allocation5 + $0x1a8] sm:$0xf]
    %v226 = vld [vmem:[#allocation5 + $0x1ac] sm:$0xf]
    %v227 = vld [vmem:[#allocation5 + $0x1b0] sm:$0xf]
    %v228 = vld [vmem:[#allocation5 + $0x1b4] sm:$0xf]
    %v229 = vld [vmem:[#allocation5 + $0x1b8] sm:$0xf]
    %v230 = vld [vmem:[#allocation5 + $0x1bc] sm:$0xf]
    %v231 = vld [vmem:[#allocation7] sm:$0x1]
    %v233 = vlaneseq
    %v234 = vshrl.u32 %v233, 7
    %v235 = vsub.s32 0, %v234
    %v236 = vrot.slane %v231, %v235
    %v242 = vunpack.c.l.b16 %v115
    %v243 = vunpack.c.h.b16 %v115
    %v244 = vunpack.c.l.b16 %v116
    %v245 = vunpack.c.h.b16 %v116
    %v246 = vunpack.c.l.b16 %v117
    %v247 = vunpack.c.h.b16 %v117
    %v248 = vunpack.c.l.b16 %v118
    %v249 = vpack.c.b16 %v242, %v242
    %v250 = vpack.c.b16 %v243, %v243
    %v251 = vpack.c.b16 %v244, %v244
    %v252 = vpack.c.b16 %v245, %v245
    %v253 = vpack.c.b16 %v246, %v246
    %v254 = vpack.c.b16 %v247, %v247
    %v255 = vpack.c.b16 %v248, %v248
    %v375 = vunpack.c.l.b16 %v119
    %v376 = vunpack.c.l.b16 %v120
    %v377 = vunpack.c.l.b16 %v121
    %v378 = vunpack.c.l.b16 %v122
    %v379 = vunpack.c.l.b16 %v123
    %v380 = vunpack.c.l.b16 %v124
    %v381 = vunpack.c.l.b16 %v125
    %v382 = vunpack.c.l.b16 %v126
    %v383 = vunpack.c.l.b16 %v127
    %v384 = vunpack.c.l.b16 %v128
    %v385 = vunpack.c.l.b16 %v129
    %v386 = vunpack.c.l.b16 %v130
    %v387 = vunpack.c.l.b16 %v131
    %v388 = vunpack.c.l.b16 %v132
    %v389 = vunpack.c.l.b16 %v133
    %v390 = vunpack.c.l.b16 %v134
    %v391 = vunpack.c.l.b16 %v135
    %v392 = vunpack.c.l.b16 %v136
    %v393 = vunpack.c.l.b16 %v137
    %v394 = vunpack.c.l.b16 %v138
    %v395 = vunpack.c.l.b16 %v139
    %v396 = vunpack.c.l.b16 %v140
    %v397 = vunpack.c.l.b16 %v141
    %v398 = vunpack.c.l.b16 %v142
    %v399 = vunpack.c.l.b16 %v143
    %v400 = vunpack.c.l.b16 %v144
    %v401 = vunpack.c.l.b16 %v145
    %v402 = vunpack.c.l.b16 %v146
    %v403 = vunpack.c.l.b16 %v147
    %v404 = vunpack.c.l.b16 %v148
    %v405 = vunpack.c.l.b16 %v149
    %v406 = vunpack.c.l.b16 %v150
    %v407 = vunpack.c.l.b16 %v151
    %v408 = vunpack.c.l.b16 %v152
    %v409 = vunpack.c.l.b16 %v153
    %v410 = vunpack.c.l.b16 %v154
    %v411 = vunpack.c.l.b16 %v155
    %v412 = vunpack.c.l.b16 %v156
    %v413 = vunpack.c.l.b16 %v157
    %v414 = vunpack.c.l.b16 %v158
    %v415 = vunpack.c.l.b16 %v159
    %v416 = vunpack.c.l.b16 %v160
    %v417 = vunpack.c.l.b16 %v161
    %v418 = vunpack.c.l.b16 %v162
    %v419 = vunpack.c.l.b16 %v163
    %v420 = vunpack.c.l.b16 %v164
    %v421 = vunpack.c.l.b16 %v165
    %v422 = vunpack.c.l.b16 %v166
    %v423 = vunpack.c.l.b16 %v167
    %v424 = vunpack.c.l.b16 %v168
    %v425 = vunpack.c.l.b16 %v169
    %v426 = vunpack.c.l.b16 %v170
    %v427 = vunpack.c.l.b16 %v171
    %v428 = vunpack.c.l.b16 %v172
    %v429 = vunpack.c.l.b16 %v173
    %v430 = vunpack.c.l.b16 %v174
    %v431 = vunpack.c.l.b16 %v175
    %v432 = vunpack.c.l.b16 %v176
    %v433 = vunpack.c.l.b16 %v177
    %v434 = vunpack.c.l.b16 %v178
    %v435 = vunpack.c.l.b16 %v179
    %v436 = vunpack.c.l.b16 %v180
    %v437 = vunpack.c.l.b16 %v181
    %v438 = vunpack.c.l.b16 %v182
    %v439 = vunpack.c.l.b16 %v183
    %v440 = vunpack.c.l.b16 %v184
    %v441 = vunpack.c.l.b16 %v185
    %v442 = vunpack.c.l.b16 %v186
    %v443 = vunpack.c.l.b16 %v187
    %v444 = vunpack.c.l.b16 %v188
    %v445 = vunpack.c.l.b16 %v189
    %v446 = vunpack.c.l.b16 %v190
    %v447 = vunpack.c.l.b16 %v191
    %v448 = vunpack.c.l.b16 %v192
    %v449 = vunpack.c.l.b16 %v193
    %v450 = vunpack.c.l.b16 %v194
    %v451 = vunpack.c.l.b16 %v195
    %v452 = vunpack.c.l.b16 %v196
    %v453 = vunpack.c.l.b16 %v197
    %v454 = vunpack.c.l.b16 %v198
    %v455 = vunpack.c.l.b16 %v199
    %v456 = vunpack.c.l.b16 %v200
    %v457 = vunpack.c.l.b16 %v201
    %v458 = vunpack.c.l.b16 %v202
    %v459 = vunpack.c.l.b16 %v203
    %v460 = vunpack.c.l.b16 %v204
    %v461 = vunpack.c.l.b16 %v205
    %v462 = vunpack.c.l.b16 %v206
    %v463 = vunpack.c.l.b16 %v207
    %v464 = vunpack.c.l.b16 %v208
    %v465 = vunpack.c.l.b16 %v209
    %v466 = vunpack.c.l.b16 %v210
    %v467 = vunpack.c.l.b16 %v211
    %v468 = vunpack.c.l.b16 %v212
    %v469 = vunpack.c.l.b16 %v213
    %v470 = vunpack.c.l.b16 %v214
    %v471 = vunpack.c.l.b16 %v215
    %v472 = vunpack.c.l.b16 %v216
    %v473 = vunpack.c.l.b16 %v217
    %v474 = vunpack.c.l.b16 %v218
    %v475 = vunpack.c.l.b16 %v219
    %v476 = vunpack.c.l.b16 %v220
    %v477 = vunpack.c.l.b16 %v221
    %v478 = vunpack.c.l.b16 %v222
    %v479 = vunpack.c.l.b16 %v223
    %v480 = vunpack.c.l.b16 %v224
    %v481 = vunpack.c.l.b16 %v225
    %v482 = vunpack.c.l.b16 %v226
    %v483 = vunpack.c.l.b16 %v227
    %v484 = vunpack.c.l.b16 %v228
    %v485 = vunpack.c.l.b16 %v229
    %v486 = vunpack.c.l.b16 %v230
    %v487 = vpack.c.b16 %v376, %v375
    %v488 = vpack.c.b16 %v378, %v377
    %v489 = vpack.c.b16 %v380, %v379
    %v490 = vpack.c.b16 %v382, %v381
    %v491 = vpack.c.b16 %v384, %v383
    %v492 = vpack.c.b16 %v386, %v385
    %v493 = vpack.c.b16 %v388, %v387
    %v494 = vpack.c.b16 %v390, %v389
    %v495 = vpack.c.b16 %v392, %v391
    %v496 = vpack.c.b16 %v394, %v393
    %v497 = vpack.c.b16 %v396, %v395
    %v498 = vpack.c.b16 %v398, %v397
    %v499 = vpack.c.b16 %v400, %v399
    %v500 = vpack.c.b16 %v402, %v401
    %v501 = vpack.c.b16 %v404, %v403
    %v502 = vpack.c.b16 %v406, %v405
    %v503 = vpack.c.b16 %v408, %v407
    %v504 = vpack.c.b16 %v410, %v409
    %v505 = vpack.c.b16 %v412, %v411
    %v506 = vpack.c.b16 %v414, %v413
    %v507 = vpack.c.b16 %v416, %v415
    %v508 = vpack.c.b16 %v418, %v417
    %v509 = vpack.c.b16 %v420, %v419
    %v510 = vpack.c.b16 %v422, %v421
    %v511 = vpack.c.b16 %v424, %v423
    %v512 = vpack.c.b16 %v426, %v425
    %v513 = vpack.c.b16 %v428, %v427
    %v514 = vpack.c.b16 %v430, %v429
    %v515 = vpack.c.b16 %v432, %v431
    %v516 = vpack.c.b16 %v434, %v433
    %v517 = vpack.c.b16 %v436, %v435
    %v518 = vpack.c.b16 %v438, %v437
    %v519 = vpack.c.b16 %v440, %v439
    %v520 = vpack.c.b16 %v442, %v441
    %v521 = vpack.c.b16 %v444, %v443
    %v522 = vpack.c.b16 %v446, %v445
    %v523 = vpack.c.b16 %v448, %v447
    %v524 = vpack.c.b16 %v450, %v449
    %v525 = vpack.c.b16 %v452, %v451
    %v526 = vpack.c.b16 %v454, %v453
    %v527 = vpack.c.b16 %v456, %v455
    %v528 = vpack.c.b16 %v458, %v457
    %v529 = vpack.c.b16 %v460, %v459
    %v530 = vpack.c.b16 %v462, %v461
    %v531 = vpack.c.b16 %v464, %v463
    %v532 = vpack.c.b16 %v466, %v465
    %v533 = vpack.c.b16 %v468, %v467
    %v534 = vpack.c.b16 %v470, %v469
    %v535 = vpack.c.b16 %v472, %v471
    %v536 = vpack.c.b16 %v474, %v473
    %v537 = vpack.c.b16 %v476, %v475
    %v538 = vpack.c.b16 %v478, %v477
    %v539 = vpack.c.b16 %v480, %v479
    %v540 = vpack.c.b16 %v482, %v481
    %v541 = vpack.c.b16 %v484, %v483
    %v542 = vpack.c.b16 %v486, %v485
    %599 = vmatprep.subr.bf16.mxu0 0
    %600 = vmatpush1.bf16.msra.mxu0 %v487
    %601 = vmatprep.subr.bf16.mxu0 0
    %602 = vmatpush1.bf16.msra.mxu0 %v488
    %603 = vmatprep.subr.bf16.mxu0 0
    %604 = vmatpush1.bf16.msra.mxu0 %v489
    %605 = vmatprep.subr.bf16.mxu0 0
    %606 = vmatpush1.bf16.msra.mxu0 %v490
    %607 = vmatprep.subr.bf16.mxu0 0
    %608 = vmatpush1.bf16.msra.mxu0 %v491
    %609 = vmatprep.subr.bf16.mxu0 0
    %610 = vmatpush1.bf16.msra.mxu0 %v492
    %611 = vmatprep.subr.bf16.mxu0 0
    %612 = vmatpush1.bf16.msra.mxu0 %v493
    %613 = vmatprep.subr.bf16.mxu0 0
    %614 = vmatpush1.bf16.msra.mxu0 %v494
    %615 = vmatprep.subr.bf16.mxu0 0
    %616 = vmatpush1.bf16.msra.mxu0 %v495
    %617 = vmatprep.subr.bf16.mxu0 0
    %618 = vmatpush1.bf16.msra.mxu0 %v496
    %619 = vmatprep.subr.bf16.mxu0 0
    %620 = vmatpush1.bf16.msra.mxu0 %v497
    %621 = vmatprep.subr.bf16.mxu0 0
    %622 = vmatpush1.bf16.msra.mxu0 %v498
    %623 = vmatprep.subr.bf16.mxu0 0
    %624 = vmatpush1.bf16.msra.mxu0 %v499
    %625 = vmatprep.subr.bf16.mxu0 0
    %626 = vmatpush1.bf16.msra.mxu0 %v500
    %627 = vmatprep.subr.bf16.mxu0 0
    %628 = vmatpush1.bf16.msra.mxu0 %v501
    %629 = vmatprep.subr.bf16.mxu0 0
    %630 = vmatpush1.bf16.msra.mxu0 %v502
    %631 = vmatprep.mubr.bf16.mxu0 %v250
    %632 = vmatmul.mubr.bf16.gmra.mrb[0].mxu0 %v249
    %v633 = vpop.f32.mrb[0].mxu0
    %v634 = vadd.f32 %v236, %v633
    %v635 = vpop.f32.mrb[0].mxu0
    %v636 = vpop.f32.mrb[0].mxu0
    %v637 = vpop.f32.mrb[0].mxu0
    %638 = vdwg.mxu0
    %639 = vmatprep.subr.bf16.mxu0 0
    %640 = vmatpush1.bf16.msra.mxu0 %v503
    %641 = vmatprep.subr.bf16.mxu0 0
    %642 = vmatpush1.bf16.msra.mxu0 %v504
    %643 = vmatprep.subr.bf16.mxu0 0
    %644 = vmatpush1.bf16.msra.mxu0 %v505
    %645 = vmatprep.subr.bf16.mxu0 0
    %646 = vmatpush1.bf16.msra.mxu0 %v506
    %647 = vmatprep.subr.bf16.mxu0 0
    %648 = vmatpush1.bf16.msra.mxu0 %v507
    %649 = vmatprep.subr.bf16.mxu0 0
    %650 = vmatpush1.bf16.msra.mxu0 %v508
    %651 = vmatprep.subr.bf16.mxu0 0
    %652 = vmatpush1.bf16.msra.mxu0 %v509
    %653 = vmatprep.subr.bf16.mxu0 0
    %654 = vmatpush1.bf16.msra.mxu0 %v510
    %655 = vmatprep.subr.bf16.mxu0 0
    %656 = vmatpush1.bf16.msra.mxu0 %v511
    %657 = vmatprep.subr.bf16.mxu0 0
    %658 = vmatpush1.bf16.msra.mxu0 %v512
    %659 = vmatprep.subr.bf16.mxu0 0
    %660 = vmatpush1.bf16.msra.mxu0 %v513
    %661 = vmatprep.subr.bf16.mxu0 0
    %662 = vmatpush1.bf16.msra.mxu0 %v514
    %663 = vmatprep.subr.bf16.mxu0 0
    %664 = vmatpush1.bf16.msra.mxu0 %v515
    %665 = vmatprep.subr.bf16.mxu0 0
    %666 = vmatpush1.bf16.msra.mxu0 %v516
    %667 = vmatprep.subr.bf16.mxu0 0
    %668 = vmatpush1.bf16.msra.mxu0 %v517
    %669 = vmatprep.subr.bf16.mxu0 0
    %670 = vmatpush1.bf16.msra.mxu0 %v518
    %671 = vmatprep.mubr.bf16.mxu0 %v252
    %672 = vmatmul.mubr.bf16.gmra.mrb[0].mxu0 %v251
    %v673 = vpop.f32.mrb[0].mxu0
    %v674 = vadd.f32 %v634, %v673
    %v675 = vpop.f32.mrb[0].mxu0
    %v676 = vpop.f32.mrb[0].mxu0
    %v677 = vpop.f32.mrb[0].mxu0
    %678 = vdwg.mxu0
    %679 = vmatprep.subr.bf16.mxu0 0
    %680 = vmatpush1.bf16.msra.mxu0 %v519
    %681 = vmatprep.subr.bf16.mxu0 0
    %682 = vmatpush1.bf16.msra.mxu0 %v520
    %683 = vmatprep.subr.bf16.mxu0 0
    %684 = vmatpush1.bf16.msra.mxu0 %v521
    %685 = vmatprep.subr.bf16.mxu0 0
    %686 = vmatpush1.bf16.msra.mxu0 %v522
    %687 = vmatprep.subr.bf16.mxu0 0
    %688 = vmatpush1.bf16.msra.mxu0 %v523
    %689 = vmatprep.subr.bf16.mxu0 0
    %690 = vmatpush1.bf16.msra.mxu0 %v524
    %691 = vmatprep.subr.bf16.mxu0 0
    %692 = vmatpush1.bf16.msra.mxu0 %v525
    %693 = vmatprep.subr.bf16.mxu0 0
    %694 = vmatpush1.bf16.msra.mxu0 %v526
    %695 = vmatprep.subr.bf16.mxu0 0
    %696 = vmatpush1.bf16.msra.mxu0 %v527
    %697 = vmatprep.subr.bf16.mxu0 0
    %698 = vmatpush1.bf16.msra.mxu0 %v528
    %699 = vmatprep.subr.bf16.mxu0 0
    %700 = vmatpush1.bf16.msra.mxu0 %v529
    %701 = vmatprep.subr.bf16.mxu0 0
    %702 = vmatpush1.bf16.msra.mxu0 %v530
    %703 = vmatprep.subr.bf16.mxu0 0
    %704 = vmatpush1.bf16.msra.mxu0 %v531
    %705 = vmatprep.subr.bf16.mxu0 0
    %706 = vmatpush1.bf16.msra.mxu0 %v532
    %707 = vmatprep.subr.bf16.mxu0 0
    %708 = vmatpush1.bf16.msra.mxu0 %v533
    %709 = vmatprep.subr.bf16.mxu0 0
    %710 = vmatpush1.bf16.msra.mxu0 %v534
    %711 = vmatprep.mubr.bf16.mxu0 %v254
    %712 = vmatmul.mubr.bf16.gmra.mrb[0].mxu0 %v253
    %v713 = vpop.f32.mrb[0].mxu0
    %v714 = vadd.f32 %v674, %v713
    %v715 = vpop.f32.mrb[0].mxu0
    %v716 = vpop.f32.mrb[0].mxu0
    %v717 = vpop.f32.mrb[0].mxu0
    %718 = vdwg.mxu0
    %719 = vmatprep.subr.bf16.mxu0 0
    %720 = vmatpush1.bf16.msra.mxu0 %v535
    %721 = vmatprep.subr.bf16.mxu0 0
    %722 = vmatpush1.bf16.msra.mxu0 %v536
    %723 = vmatprep.subr.bf16.mxu0 0
    %724 = vmatpush1.bf16.msra.mxu0 %v537
    %725 = vmatprep.subr.bf16.mxu0 0
    %726 = vmatpush1.bf16.msra.mxu0 %v538
    %727 = vmatprep.subr.bf16.mxu0 0
    %728 = vmatpush1.bf16.msra.mxu0 %v539
    %729 = vmatprep.subr.bf16.mxu0 0
    %730 = vmatpush1.bf16.msra.mxu0 %v540
    %731 = vmatprep.subr.bf16.mxu0 0
    %732 = vmatpush1.bf16.msra.mxu0 %v541
    %733 = vmatprep.subr.bf16.mxu0 0
    %734 = vmatpush1.bf16.msra.mxu0 %v542
    %735 = vmatprep.subr.bf16.mxu0 0
    %736 = vmatpush1.bf16.msra.mxu0 0
    %737 = vmatprep.subr.bf16.mxu0 0
    %738 = vmatpush1.bf16.msra.mxu0 0
    %739 = vmatprep.subr.bf16.mxu0 0
    %740 = vmatpush1.bf16.msra.mxu0 0
    %741 = vmatprep.subr.bf16.mxu0 0
    %742 = vmatpush1.bf16.msra.mxu0 0
    %743 = vmatprep.subr.bf16.mxu0 0
    %744 = vmatpush1.bf16.msra.mxu0 0
    %745 = vmatprep.subr.bf16.mxu0 0
    %746 = vmatpush1.bf16.msra.mxu0 0
    %747 = vmatprep.subr.bf16.mxu0 0
    %748 = vmatpush1.bf16.msra.mxu0 0
    %749 = vmatprep.subr.bf16.mxu0 0
    %750 = vmatpush1.bf16.msra.mxu0 0
    %751 = vmatprep.mubr.bf16.mxu0 0
    %752 = vmatmul.mubr.bf16.gmra.mrb[0].mxu0 %v255
    %v753 = vpop.f32.mrb[0].mxu0
    %v754 = vadd.f32 %v714, %v753
    %v755 = vpop.f32.mrb[0].mxu0
    %v756 = vpop.f32.mrb[0].mxu0
    %v757 = vpop.f32.mrb[0].mxu0
    %758 = vdwg.mxu0
    %v759 = vmax.f32 %v754, 0.0
    %v760 = vpack.c.bf16 %v759, %v759
    %v761 = vld [vmem:[#allocation8] sm:$0xf]
    %v762 = vld [vmem:[#allocation8 + $0x4] sm:$0xf]
    %v763 = vld [vmem:[#allocation8 + $0x8] sm:$0xf]
    %v764 = vld [vmem:[#allocation8 + $0xc] sm:$0xf]
    %v765 = vld [vmem:[#allocation8 + $0x10] sm:$0xf]
    %v766 = vld [vmem:[#allocation8 + $0x14] sm:$0xf]
    %v767 = vld [vmem:[#allocation8 + $0x18] sm:$0xf]
    %v768 = vld [vmem:[#allocation8 + $0x1c] sm:$0xf]
    %v769 = vld [vmem:[#allocation8 + $0x20] sm:$0xf]
    %v770 = vld [vmem:[#allocation8 + $0x24] sm:$0xf]
    %v771 = vld [vmem:[#allocation8 + $0x28] sm:$0xf]
    %v772 = vld [vmem:[#allocation8 + $0x2c] sm:$0xf]
    %v773 = vld [vmem:[#allocation8 + $0x30] sm:$0xf]
    %v774 = vld [vmem:[#allocation8 + $0x34] sm:$0xf]
    %v775 = vld [vmem:[#allocation8 + $0x38] sm:$0xf]
    %v776 = vld [vmem:[#allocation8 + $0x3c] sm:$0xf]
    %v777 = vld [vmem:[#allocation10] sm:$0x1]
    %v779 = vlaneseq
    %v780 = vshrl.u32 %v779, 7
    %v781 = vsub.s32 0, %v780
    %v782 = vrot.slane %v777, %v781
    %v800 = vunpack.c.l.b16 %v761
    %v801 = vunpack.c.l.b16 %v762
    %v802 = vunpack.c.l.b16 %v763
    %v803 = vunpack.c.l.b16 %v764
    %v804 = vunpack.c.l.b16 %v765
    %v805 = vunpack.c.l.b16 %v766
    %v806 = vunpack.c.l.b16 %v767
    %v807 = vunpack.c.l.b16 %v768
    %v808 = vunpack.c.l.b16 %v769
    %v809 = vunpack.c.l.b16 %v770
    %v810 = vunpack.c.l.b16 %v771
    %v811 = vunpack.c.l.b16 %v772
    %v812 = vunpack.c.l.b16 %v773
    %v813 = vunpack.c.l.b16 %v774
    %v814 = vunpack.c.l.b16 %v775
    %v815 = vunpack.c.l.b16 %v776
    %v816 = vpack.c.b16 %v801, %v800
    %v817 = vpack.c.b16 %v803, %v802
    %v818 = vpack.c.b16 %v805, %v804
    %v819 = vpack.c.b16 %v807, %v806
    %v820 = vpack.c.b16 %v809, %v808
    %v821 = vpack.c.b16 %v811, %v810
    %v822 = vpack.c.b16 %v813, %v812
    %v823 = vpack.c.b16 %v815, %v814
    %832 = vmatprep.subr.bf16.mxu0 0
    %833 = vmatpush1.bf16.msra.mxu0 %v816
    %834 = vmatprep.subr.bf16.mxu0 0
    %835 = vmatpush1.bf16.msra.mxu0 %v817
    %836 = vmatprep.subr.bf16.mxu0 0
    %837 = vmatpush1.bf16.msra.mxu0 %v818
    %838 = vmatprep.subr.bf16.mxu0 0
    %839 = vmatpush1.bf16.msra.mxu0 %v819
    %840 = vmatprep.subr.bf16.mxu0 0
    %841 = vmatpush1.bf16.msra.mxu0 %v820
    %842 = vmatprep.subr.bf16.mxu0 0
    %843 = vmatpush1.bf16.msra.mxu0 %v821
    %844 = vmatprep.subr.bf16.mxu0 0
    %845 = vmatpush1.bf16.msra.mxu0 %v822
    %846 = vmatprep.subr.bf16.mxu0 0
    %847 = vmatpush1.bf16.msra.mxu0 %v823
    %848 = vmatprep.subr.bf16.mxu0 0
    %849 = vmatpush1.bf16.msra.mxu0 0
    %850 = vmatprep.subr.bf16.mxu0 0
    %851 = vmatpush1.bf16.msra.mxu0 0
    %852 = vmatprep.subr.bf16.mxu0 0
    %853 = vmatpush1.bf16.msra.mxu0 0
    %854 = vmatprep.subr.bf16.mxu0 0
    %855 = vmatpush1.bf16.msra.mxu0 0
    %856 = vmatprep.subr.bf16.mxu0 0
    %857 = vmatpush1.bf16.msra.mxu0 0
    %858 = vmatprep.subr.bf16.mxu0 0
    %859 = vmatpush1.bf16.msra.mxu0 0
    %860 = vmatprep.subr.bf16.mxu0 0
    %861 = vmatpush1.bf16.msra.mxu0 0
    %862 = vmatprep.subr.bf16.mxu0 0
    %863 = vmatpush1.bf16.msra.mxu0 0
    %864 = vmatprep.mubr.bf16.mxu0 0
    %865 = vmatmul.mubr.bf16.gmra.mrb[0].mxu0 %v760
    %v866 = vpop.f32.mrb[0].mxu0
    %v867 = vadd.f32 %v782, %v866
    %v868 = vpop.f32.mrb[0].mxu0
    %v869 = vpop.f32.mrb[0].mxu0
    %v870 = vpop.f32.mrb[0].mxu0
    %871 = vdwg.mxu0
    %v872 = vmax.f32 %v867, 0.0
    %v873 = vpack.c.bf16 %v872, %v872
    %v874 = vld [vmem:[#allocation11] sm:$0xf]
    %v875 = vld [vmem:[#allocation11 + $0x4] sm:$0xf]
    %v876 = vld [vmem:[#allocation11 + $0x8] sm:$0xf]
    %v877 = vld [vmem:[#allocation11 + $0xc] sm:$0xf]
    %v878 = vld [vmem:[#allocation11 + $0x10] sm:$0xf]
    %v879 = vld [vmem:[#allocation11 + $0x14] sm:$0xf]
    %v880 = vld [vmem:[#allocation11 + $0x18] sm:$0xf]
    %v881 = vld [vmem:[#allocation11 + $0x1c] sm:$0xf]
    %v882 = vld [vmem:[#allocation11 + $0x20] sm:$0xf]
    %v883 = vld [vmem:[#allocation11 + $0x24] sm:$0xf]
    %v884 = vld [vmem:[#allocation11 + $0x28] sm:$0xf]
    %v885 = vld [vmem:[#allocation11 + $0x2c] sm:$0xf]
    %v886 = vld [vmem:[#allocation11 + $0x30] sm:$0xf]
    %v887 = vld [vmem:[#allocation11 + $0x34] sm:$0xf]
    %v888 = vld [vmem:[#allocation11 + $0x38] sm:$0xf]
    %v889 = vld [vmem:[#allocation11 + $0x3c] sm:$0xf]
    %v890 = vld [vmem:[#allocation13] sm:$0x1]
    %v892 = vlaneseq
    %v893 = vshrl.u32 %v892, 7
    %v894 = vsub.s32 0, %v893
    %v895 = vrot.slane %v890, %v894
    %v913 = vunpack.c.l.b16 %v874
    %v914 = vunpack.c.l.b16 %v875
    %v915 = vunpack.c.l.b16 %v876
    %v916 = vunpack.c.l.b16 %v877
    %v917 = vunpack.c.l.b16 %v878
    %v918 = vunpack.c.l.b16 %v879
    %v919 = vunpack.c.l.b16 %v880
    %v920 = vunpack.c.l.b16 %v881
    %v921 = vunpack.c.l.b16 %v882
    %v922 = vunpack.c.l.b16 %v883
    %v923 = vunpack.c.l.b16 %v884
    %v924 = vunpack.c.l.b16 %v885
    %v925 = vunpack.c.l.b16 %v886
    %v926 = vunpack.c.l.b16 %v887
    %v927 = vunpack.c.l.b16 %v888
    %v928 = vunpack.c.l.b16 %v889
    %v929 = vpack.c.b16 %v914, %v913
    %v930 = vpack.c.b16 %v916, %v915
    %v931 = vpack.c.b16 %v918, %v917
    %v932 = vpack.c.b16 %v920, %v919
    %v933 = vpack.c.b16 %v922, %v921
    %v934 = vpack.c.b16 %v924, %v923
    %v935 = vpack.c.b16 %v926, %v925
    %v936 = vpack.c.b16 %v928, %v927
    %945 = vmatprep.subr.bf16.mxu0 0
    %946 = vmatpush1.bf16.msra.mxu0 %v929
    %947 = vmatprep.subr.bf16.mxu0 0
    %948 = vmatpush1.bf16.msra.mxu0 %v930
    %949 = vmatprep.subr.bf16.mxu0 0
    %950 = vmatpush1.bf16.msra.mxu0 %v931
    %951 = vmatprep.subr.bf16.mxu0 0
    %952 = vmatpush1.bf16.msra.mxu0 %v932
    %953 = vmatprep.subr.bf16.mxu0 0
    %954 = vmatpush1.bf16.msra.mxu0 %v933
    %955 = vmatprep.subr.bf16.mxu0 0
    %956 = vmatpush1.bf16.msra.mxu0 %v934
    %957 = vmatprep.subr.bf16.mxu0 0
    %958 = vmatpush1.bf16.msra.mxu0 %v935
    %959 = vmatprep.subr.bf16.mxu0 0
    %960 = vmatpush1.bf16.msra.mxu0 %v936
    %961 = vmatprep.subr.bf16.mxu0 0
    %962 = vmatpush1.bf16.msra.mxu0 0
    %963 = vmatprep.subr.bf16.mxu0 0
    %964 = vmatpush1.bf16.msra.mxu0 0
    %965 = vmatprep.subr.bf16.mxu0 0
    %966 = vmatpush1.bf16.msra.mxu0 0
    %967 = vmatprep.subr.bf16.mxu0 0
    %968 = vmatpush1.bf16.msra.mxu0 0
    %969 = vmatprep.subr.bf16.mxu0 0
    %970 = vmatpush1.bf16.msra.mxu0 0
    %971 = vmatprep.subr.bf16.mxu0 0
    %972 = vmatpush1.bf16.msra.mxu0 0
    %973 = vmatprep.subr.bf16.mxu0 0
    %974 = vmatpush1.bf16.msra.mxu0 0
    %975 = vmatprep.subr.bf16.mxu0 0
    %976 = vmatpush1.bf16.msra.mxu0 0
    %977 = vmatprep.mubr.bf16.mxu0 0
    %978 = vmatmul.mubr.bf16.gmra.mrb[0].mxu0 %v873
    %v979 = vpop.f32.mrb[0].mxu0
    %v980 = vadd.f32 %v895, %v979
    %v981 = vpop.f32.mrb[0].mxu0
    %v982 = vpop.f32.mrb[0].mxu0
    %v983 = vpop.f32.mrb[0].mxu0
    %984 = vdwg.mxu0
    %985 = vst [vmem:[#allocation14] sm:$0xff] %v980
    // Predicated region
    $region58: #{tpu_custom_call.1} parent=1 // pred_check
      _
    $region59: #{tpu_custom_call.1} parent=1 // pred_check_branch
      %987 = sbr.rel (0) target = $region61
    $region60: #{tpu_custom_call.1} parent=1 // pred_region
      %s989 = ssub.s32 128, 128
      %990 = vsyncadd [#allocation4], %s989
      %s992 = sshll.u32 [#allocation14], 4
      %s993 = int_to_ptr.vmem [resolvable:$true] %s992
      %995 = dma.vmem_to_hbm [thread:$0]  %s993, 128, %s7, [#allocation4]
    $region61: #{tpu_custom_call.1} parent=1 // pred_fallthru
      _
    // Predicated region
    $region62: #{tpu_custom_call.1} parent=1 // pred_check
      _
    $region63: #{tpu_custom_call.1} parent=1 // pred_check_branch
      %997 = sbr.rel (0) target = $region65
    $region64: #{tpu_custom_call.1} parent=1 // pred_region
      %998 = dma.done [#allocation4], 128
    $region65: #{tpu_custom_call.1} parent=1 // pred_fallthru
      _
    %999 = vsyncpa [#allocation3], 1
    %1000 = vsyncpa [#allocation6], 1
    %1001 = vsyncpa [#allocation9], 1
    %1002 = vsyncpa [#allocation12], 1
    %1003 = vsyncpa [#allocation4], 1

</llo_original>
